<compile_context>
chip_gen: v6e
topology: v6e:2x2x1
jax: 0.10.0
libtpu: 0.0.40
codegen_flags: <defaults>
</compile_context>

<pallas_src>
import jax
import jax.numpy as jnp
from jax.experimental import pallas as pl
from jax.experimental.pallas import tpu as pltpu

LANE = 128      # lane (last-dim) tile width
SUBLANE = 8     # sublane tile height
LN_EPS = 1e-5


def _round_up(x, m):
    return ((x + m - 1) // m) * m


def build_net_dims(item_emb_dim, user_num, hidden_num):
    """Replicates get_user_net() dimension logic exactly."""
    item_user_gap = int((user_num - item_emb_dim) / (hidden_num + 1))
    hiddens_dim = [(x + 1) * item_user_gap for x in range(hidden_num)]
    return [item_emb_dim] + hiddens_dim + [user_num]


def init_params(key, net_dims):
    """PyTorch-default init: Linear U(-1/sqrt(fan_in), ...); LayerNorm weight=1, bias=0.
    Returns one tuple per layer: (W, b) for the last layer, (W, b, gamma, beta) otherwise.
    W is stored (in_dim, out_dim) -- transpose of nn.Linear layout, same semantics."""
    layers = []
    L = len(net_dims) - 1
    for j in range(L):
        din, dout = net_dims[j], net_dims[j + 1]
        key, kw, kb = jax.random.split(key, 3)
        bound = 1.0 / float(din) ** 0.5
        W = jax.random.uniform(kw, (din, dout), jnp.float32, -bound, bound)
        b = jax.random.uniform(kb, (dout,), jnp.float32, -bound, bound)
        if j < L - 1:
            layers.append((W, b,
                           jnp.ones((dout,), jnp.float32),
                           jnp.zeros((dout,), jnp.float32)))
        else:
            layers.append((W, b))
    return layers


def pack_params(params, net_dims, matmul_dtype):
    """Pack all weights into one row-stacked, 128-column-padded slab (matmul dtype)
    and all bias/gamma/beta vectors into one small f32 slab.  Padding is zeros, so
    padded rows/columns contribute exactly nothing to the matmuls."""
    L = len(net_dims) - 1
    dpad = [_round_up(d, LANE) for d in net_dims]
    col = max(dpad[1:])

    row_off = [0]
    for j in range(L):
        row_off.append(row_off[-1] + dpad[j])

    wpack = jnp.zeros((row_off[-1], col), matmul_dtype)
    nvec = 3 * (L - 1) + 1
    vpack = jnp.zeros((_round_up(nvec, SUBLANE), col), jnp.float32)

    vrows = []
    vr = 0
    for j in range(L):
        p = params[j]
        W, b = p[0], p[1]
        din, dout = net_dims[j], net_dims[j + 1]
        wpack = wpack.at[row_off[j]:row_off[j] + din, :dout].set(W.astype(matmul_dtype))
        rows = {"b": vr}
        vpack = vpack.at[vr, :dout].set(b)
        vr += 1
        if len(p) == 4:
            vpack = vpack.at[vr, :dout].set(p[2]); rows["gamma"] = vr; vr += 1
            vpack = vpack.at[vr, :dout].set(p[3]); rows["beta"] = vr; vr += 1
        vrows.append(rows)

    meta = dict(dpad=dpad, col=col, row_off=row_off, vrows=vrows)
    return wpack, vpack, meta


def make_kernel(net_dims, meta, matmul_dtype):
    L = len(net_dims) - 1
    dpad, row_off, vrows = meta["dpad"], meta["row_off"], meta["vrows"]

    def kernel(x_ref, w_ref, v_ref, o_ref):
        h = x_ref[...].astype(jnp.float32)                       # (tile_b, dpad[0])
        for j in range(L):
            dout = net_dims[j + 1]
            dpi, dpo = dpad[j], dpad[j + 1]
            W = w_ref[row_off[j]:row_off[j] + dpi, :dpo]          # padded block, zeros outside
            rb = vrows[j]["b"]
            b = v_ref[rb:rb + 1, :dpo]                            # (1, dpo) f32
            # MXU matmul: cast inputs to matmul dtype right before the dot,
            # accumulate in f32; all surrounding elementwise stays f32.
            h = jnp.dot(h.astype(matmul_dtype), W,
                        preferred_element_type=jnp.float32) + b
            if j < L - 1:
                rg, rbeta = vrows[j]["gamma"], vrows[j]["beta"]
                gamma = v_ref[rg:rg + 1, :dpo]
                beta = v_ref[rbeta:rbeta + 1, :dpo]
                # LayerNorm over the *real* dout features only.
                # Padded lanes of pre-LN h are exactly 0 (zero W cols / zero b),
                # so the masked two-pass form below matches PyTorch exactly.
                mask = jax.lax.broadcasted_iota(jnp.int32, (1, dpo), 1) < dout
                mu = jnp.sum(h, axis=-1, keepdims=True) / dout
                cent = jnp.where(mask, h - mu, 0.0)
                var = jnp.sum(cent * cent, axis=-1, keepdims=True) / dout
                h = cent * jax.lax.rsqrt(var + LN_EPS)
                h = h * gamma + beta          # padded lanes: gamma = beta = 0
            h = jax.nn.sigmoid(h)
        o_ref[...] = h.astype(o_ref.dtype)    # lane-dense (multiple-of-128) store

    return kernel


def user_preference_net_forward(x, params, net_dims, *, tile_b=None,
                                matmul_dtype=jnp.bfloat16):
    B, D_in = x.shape
    assert D_in == net_dims[0]
    L = len(net_dims) - 1
    user_num = net_dims[-1]

    wpack, vpack, meta = pack_params(params, net_dims, matmul_dtype)
    dpad = meta["dpad"]

    # Batch tiling: prefer large tiles (MXU / HBM efficiency) but keep at least
    # 2 grid steps so the parallel batch axis can shard across v7x's 2 TensorCores.
    B_pad = _round_up(B, SUBLANE)
    if tile_b is None:
        tile_b = max(SUBLANE, min(512, _round_up(pl.cdiv(B_pad, 2), SUBLANE)))
    tile_b = _round_up(min(tile_b, B_pad), SUBLANE)
    B_pad = _round_up(B_pad, tile_b)
    grid = (B_pad // tile_b,)

    # Lane-dense, zero-padded input slab.
    x_pad = jnp.zeros((B_pad, dpad[0]), jnp.float32).at[:B, :D_in].set(
        x.astype(jnp.float32))

    kernel = make_kernel(net_dims, meta, matmul_dtype)

    x_spec = pl.BlockSpec((tile_b, dpad[0]), lambda i: (i, 0))
    w_spec = pl.BlockSpec(wpack.shape, lambda i: (0, 0))   # grid-invariant param pack
    v_spec = pl.BlockSpec(vpack.shape, lambda i: (0, 0))   # grid-invariant param pack
    out_spec = pl.BlockSpec((tile_b, dpad[-1]), lambda i: (i, 0))

    flops = 2 * B_pad * sum(net_dims[j] * net_dims[j + 1] for j in range(L))
    transcendentals = B_pad * (sum(net_dims[1:]) + (L - 1))
    bytes_accessed = int(x_pad.size * 4 + B_pad * dpad[-1] * 4
                         + wpack.size * wpack.dtype.itemsize + vpack.size * 4)

    out = pl.pallas_call(
        kernel,
        out_shape=jax.ShapeDtypeStruct((B_pad, dpad[-1]), jnp.float32),
        grid_spec=pltpu.PrefetchScalarGridSpec(
            num_scalar_prefetch=0,
            grid=grid,
            in_specs=[x_spec, w_spec, v_spec],
            out_specs=out_spec,
        ),
        compiler_params=pltpu.CompilerParams(
            dimension_semantics=("parallel",),
        ),
        cost_estimate=pl.CostEstimate(
            flops=flops,
            transcendentals=transcendentals,
            bytes_accessed=bytes_accessed,
        ),
    )(x_pad, wpack, vpack)

    return out[:B, :user_num]


def reference_forward(x, params, net_dims, matmul_dtype=jnp.float32):
    """Plain-JAX reference mirroring the PyTorch module (and the kernel's matmul dtype)."""
    L = len(net_dims) - 1
    h = x.astype(jnp.float32)
    for j in range(L):
        p = params[j]
        W, b = p[0], p[1]
        h = jnp.dot(h.astype(matmul_dtype), W.astype(matmul_dtype),
                    preferred_element_type=jnp.float32) + b
        if j < L - 1:
            gamma, beta = p[2], p[3]
            mu = jnp.mean(h, axis=-1, keepdims=True)
            var = jnp.mean((h - mu) ** 2, axis=-1, keepdims=True)
            h = (h - mu) * jax.lax.rsqrt(var + LN_EPS)
            h = h * gamma + beta
        h = jax.nn.sigmoid(h)
    return h


if __name__ == "__main__":
    # Small, module-consistent shapes.
    item_emb_dim, user_num, hidden_num = 16, 64, 2
    batch = 16

    net_dims = build_net_dims(item_emb_dim, user_num, hidden_num)  # [16, 16, 32, 64]

    key = jax.random.PRNGKey(0)
    key, kx = jax.random.split(key)
    x = jax.random.normal(kx, (batch, item_emb_dim), jnp.float32)
    params = init_params(key, net_dims)

    # 1) f32-matmul path: tight check against the f32 reference.
    out_f32 = jax.block_until_ready(
        user_preference_net_forward(x, params, net_dims, matmul_dtype=jnp.float32))
    ref_f32 = reference_forward(x, params, net_dims, matmul_dtype=jnp.float32)
    assert out_f32.shape == (batch, user_num)
    assert jnp.allclose(out_f32, ref_f32, atol=1e-5, rtol=1e-5), \
        float(jnp.max(jnp.abs(out_f32 - ref_f32)))

    # 2) Default bf16-matmul path (MXU-native on v6e/v7x; f32 accumulation,
    #    f32 LayerNorm/sigmoid), checked against the bf16-cast reference.
    out_bf16 = jax.block_until_ready(
        user_preference_net_forward(x, params, net_dims))
    ref_bf16 = reference_forward(x, params, net_dims, matmul_dtype=jnp.bfloat16)
    assert out_bf16.shape == (batch, user_num)
    assert jnp.allclose(out_bf16, ref_bf16, atol=5e-3, rtol=5e-3), \
        float(jnp.max(jnp.abs(out_bf16 - ref_bf16)))

    print("KERNEL_OK")
</pallas_src>

<mosaic_0001>
module attributes {stable_mosaic.version = 11 : i64} {
  func.func @kernel(%arg0: i32, %arg1: memref<8x128xf32, #tpu.memory_space<vmem>>, %arg2: memref<384x128xf32, #tpu.memory_space<vmem>>, %arg3: memref<8x128xf32, #tpu.memory_space<vmem>>, %arg4: memref<8x128xf32, #tpu.memory_space<vmem>>) attributes {dimension_semantics = [#tpu.dimension_semantics<parallel>], iteration_bounds = array<i64: 2>, scalar_prefetch = 0 : i64, scratch_operands = 0 : i64, tpu.core_type = #tpu.core_type<tc>, window_params = [{transform_indices = @transform_0, window_bounds = array<i64: 8, 128>}, {pipeline_mode = #tpu.pipeline_mode<synchronous>, transform_indices = @transform_1, window_bounds = array<i64: 384, 128>}, {pipeline_mode = #tpu.pipeline_mode<synchronous>, transform_indices = @transform_2, window_bounds = array<i64: 8, 128>}, {transform_indices = @transform_3, window_bounds = array<i64: 8, 128>}]} {
    %c0 = arith.constant 0 : index
    %c0_0 = arith.constant 0 : index
    %0 = vector.load %arg1[%c0, %c0_0] : memref<8x128xf32, #tpu.memory_space<vmem>>, vector<8x128xf32>
    %c0_1 = arith.constant 0 : index
    %c0_2 = arith.constant 0 : index
    %1 = vector.load %arg2[%c0_1, %c0_2] : memref<384x128xf32, #tpu.memory_space<vmem>>, vector<128x128xf32>
    %c0_3 = arith.constant 0 : index
    %c0_4 = arith.constant 0 : index
    %2 = vector.load %arg3[%c0_3, %c0_4] : memref<8x128xf32, #tpu.memory_space<vmem>>, vector<1x128xf32>
    %cst = arith.constant dense<0.000000e+00> : vector<8x128xf32>
    %3 = tpu.matmul %0, %1, %cst {dimension_numbers = #tpu.dot_dimension_numbers<[1], [0], [0], [1], [0, 0, 1, 1], [], []>} : vector<8x128xf32>, vector<128x128xf32>, vector<8x128xf32> -> vector<8x128xf32>
    %4 = vector.broadcast %2 : vector<1x128xf32> to vector<8x128xf32>
    %5 = arith.addf %3, %4 : vector<8x128xf32>
    %c1 = arith.constant 1 : index
    %c0_5 = arith.constant 0 : index
    %6 = vector.load %arg3[%c1, %c0_5] : memref<8x128xf32, #tpu.memory_space<vmem>>, vector<1x128xf32>
    %c2 = arith.constant 2 : index
    %c0_6 = arith.constant 0 : index
    %7 = vector.load %arg3[%c2, %c0_6] : memref<8x128xf32, #tpu.memory_space<vmem>>, vector<1x128xf32>
    %8 = tpu.iota {dimensions = array<i32: 1>} : vector<1x128xi32>
    %c16_i32 = arith.constant 16 : i32
    %9 = vector.broadcast %c16_i32 : i32 to vector<1x128xi32>
    %10 = arith.cmpi slt, %8, %9 : vector<1x128xi32>
    %cst_7 = arith.constant dense<0.000000e+00> : vector<8xf32>
    %11 = vector.multi_reduction <add>, %5, %cst_7 [1] : vector<8x128xf32> to vector<8xf32>
    %12 = vector.shape_cast %11 : vector<8xf32> to vector<8x1xf32>
    %cst_8 = arith.constant 1.600000e+01 : f32
    %13 = vector.broadcast %cst_8 : f32 to vector<8x1xf32>
    %14 = arith.divf %12, %13 : vector<8x1xf32>
    %15 = vector.broadcast %14 : vector<8x1xf32> to vector<8x128xf32>
    %16 = arith.subf %5, %15 : vector<8x128xf32>
    %cst_9 = arith.constant 0.000000e+00 : f32
    %17 = vector.shape_cast %10 : vector<1x128xi1> to vector<1x128xi1>
    %18 = vector.broadcast %17 : vector<1x128xi1> to vector<8x128xi1>
    %19 = vector.broadcast %cst_9 : f32 to vector<8x128xf32>
    %20 = arith.select %18, %16, %19 : vector<8x128xi1>, vector<8x128xf32>
    %21 = arith.mulf %20, %20 : vector<8x128xf32>
    %cst_10 = arith.constant dense<0.000000e+00> : vector<8xf32>
    %22 = vector.multi_reduction <add>, %21, %cst_10 [1] : vector<8x128xf32> to vector<8xf32>
    %23 = vector.shape_cast %22 : vector<8xf32> to vector<8x1xf32>
    %cst_11 = arith.constant 1.600000e+01 : f32
    %24 = vector.broadcast %cst_11 : f32 to vector<8x1xf32>
    %25 = arith.divf %23, %24 : vector<8x1xf32>
    %cst_12 = arith.constant 9.99999974E-6 : f32
    %26 = vector.broadcast %cst_12 : f32 to vector<8x1xf32>
    %27 = arith.addf %25, %26 : vector<8x1xf32>
    %28 = math.rsqrt %27 : vector<8x1xf32>
    %29 = vector.broadcast %28 : vector<8x1xf32> to vector<8x128xf32>
    %30 = arith.mulf %20, %29 : vector<8x128xf32>
    %31 = vector.broadcast %6 : vector<1x128xf32> to vector<8x128xf32>
    %32 = arith.mulf %30, %31 : vector<8x128xf32>
    %33 = vector.broadcast %7 : vector<1x128xf32> to vector<8x128xf32>
    %34 = arith.addf %32, %33 : vector<8x128xf32>
    %35 = arith.negf %34 : vector<8x128xf32>
    %36 = math.exp %35 : vector<8x128xf32>
    %cst_13 = arith.constant 1.000000e+00 : f32
    %37 = vector.broadcast %cst_13 : f32 to vector<8x128xf32>
    %38 = arith.addf %37, %36 : vector<8x128xf32>
    %39 = arith.divf %37, %38 : vector<8x128xf32>
    %c128 = arith.constant 128 : index
    %c0_14 = arith.constant 0 : index
    %40 = vector.load %arg2[%c128, %c0_14] : memref<384x128xf32, #tpu.memory_space<vmem>>, vector<128x128xf32>
    %c3 = arith.constant 3 : index
    %c0_15 = arith.constant 0 : index
    %41 = vector.load %arg3[%c3, %c0_15] : memref<8x128xf32, #tpu.memory_space<vmem>>, vector<1x128xf32>
    %cst_16 = arith.constant dense<0.000000e+00> : vector<8x128xf32>
    %42 = tpu.matmul %39, %40, %cst_16 {dimension_numbers = #tpu.dot_dimension_numbers<[1], [0], [0], [1], [0, 0, 1, 1], [], []>} : vector<8x128xf32>, vector<128x128xf32>, vector<8x128xf32> -> vector<8x128xf32>
    %43 = vector.broadcast %41 : vector<1x128xf32> to vector<8x128xf32>
    %44 = arith.addf %42, %43 : vector<8x128xf32>
    %c4 = arith.constant 4 : index
    %c0_17 = arith.constant 0 : index
    %45 = vector.load %arg3[%c4, %c0_17] : memref<8x128xf32, #tpu.memory_space<vmem>>, vector<1x128xf32>
    %c5 = arith.constant 5 : index
    %c0_18 = arith.constant 0 : index
    %46 = vector.load %arg3[%c5, %c0_18] : memref<8x128xf32, #tpu.memory_space<vmem>>, vector<1x128xf32>
    %47 = tpu.iota {dimensions = array<i32: 1>} : vector<1x128xi32>
    %c32_i32 = arith.constant 32 : i32
    %48 = vector.broadcast %c32_i32 : i32 to vector<1x128xi32>
    %49 = arith.cmpi slt, %47, %48 : vector<1x128xi32>
    %cst_19 = arith.constant dense<0.000000e+00> : vector<8xf32>
    %50 = vector.multi_reduction <add>, %44, %cst_19 [1] : vector<8x128xf32> to vector<8xf32>
    %51 = vector.shape_cast %50 : vector<8xf32> to vector<8x1xf32>
    %cst_20 = arith.constant 3.200000e+01 : f32
    %52 = vector.broadcast %cst_20 : f32 to vector<8x1xf32>
    %53 = arith.divf %51, %52 : vector<8x1xf32>
    %54 = vector.broadcast %53 : vector<8x1xf32> to vector<8x128xf32>
    %55 = arith.subf %44, %54 : vector<8x128xf32>
    %cst_21 = arith.constant 0.000000e+00 : f32
    %56 = vector.shape_cast %49 : vector<1x128xi1> to vector<1x128xi1>
    %57 = vector.broadcast %56 : vector<1x128xi1> to vector<8x128xi1>
    %58 = vector.broadcast %cst_21 : f32 to vector<8x128xf32>
    %59 = arith.select %57, %55, %58 : vector<8x128xi1>, vector<8x128xf32>
    %60 = arith.mulf %59, %59 : vector<8x128xf32>
    %cst_22 = arith.constant dense<0.000000e+00> : vector<8xf32>
    %61 = vector.multi_reduction <add>, %60, %cst_22 [1] : vector<8x128xf32> to vector<8xf32>
    %62 = vector.shape_cast %61 : vector<8xf32> to vector<8x1xf32>
    %cst_23 = arith.constant 3.200000e+01 : f32
    %63 = vector.broadcast %cst_23 : f32 to vector<8x1xf32>
    %64 = arith.divf %62, %63 : vector<8x1xf32>
    %cst_24 = arith.constant 9.99999974E-6 : f32
    %65 = vector.broadcast %cst_24 : f32 to vector<8x1xf32>
    %66 = arith.addf %64, %65 : vector<8x1xf32>
    %67 = math.rsqrt %66 : vector<8x1xf32>
    %68 = vector.broadcast %67 : vector<8x1xf32> to vector<8x128xf32>
    %69 = arith.mulf %59, %68 : vector<8x128xf32>
    %70 = vector.broadcast %45 : vector<1x128xf32> to vector<8x128xf32>
    %71 = arith.mulf %69, %70 : vector<8x128xf32>
    %72 = vector.broadcast %46 : vector<1x128xf32> to vector<8x128xf32>
    %73 = arith.addf %71, %72 : vector<8x128xf32>
    %74 = arith.negf %73 : vector<8x128xf32>
    %75 = math.exp %74 : vector<8x128xf32>
    %cst_25 = arith.constant 1.000000e+00 : f32
    %76 = vector.broadcast %cst_25 : f32 to vector<8x128xf32>
    %77 = arith.addf %76, %75 : vector<8x128xf32>
    %78 = arith.divf %76, %77 : vector<8x128xf32>
    %c256 = arith.constant 256 : index
    %c0_26 = arith.constant 0 : index
    %79 = vector.load %arg2[%c256, %c0_26] : memref<384x128xf32, #tpu.memory_space<vmem>>, vector<128x128xf32>
    %c6 = arith.constant 6 : index
    %c0_27 = arith.constant 0 : index
    %80 = vector.load %arg3[%c6, %c0_27] : memref<8x128xf32, #tpu.memory_space<vmem>>, vector<1x128xf32>
    %cst_28 = arith.constant dense<0.000000e+00> : vector<8x128xf32>
    %81 = tpu.matmul %78, %79, %cst_28 {dimension_numbers = #tpu.dot_dimension_numbers<[1], [0], [0], [1], [0, 0, 1, 1], [], []>} : vector<8x128xf32>, vector<128x128xf32>, vector<8x128xf32> -> vector<8x128xf32>
    %82 = vector.broadcast %80 : vector<1x128xf32> to vector<8x128xf32>
    %83 = arith.addf %81, %82 : vector<8x128xf32>
    %84 = arith.negf %83 : vector<8x128xf32>
    %85 = math.exp %84 : vector<8x128xf32>
    %cst_29 = arith.constant 1.000000e+00 : f32
    %86 = vector.broadcast %cst_29 : f32 to vector<8x128xf32>
    %87 = arith.addf %86, %85 : vector<8x128xf32>
    %88 = arith.divf %86, %87 : vector<8x128xf32>
    %c0_30 = arith.constant 0 : index
    %c0_31 = arith.constant 0 : index
    %89 = vector.load %arg4[%c0_30, %c0_31] : memref<8x128xf32, #tpu.memory_space<vmem>>, vector<8x128xf32>
    tpu.vector_store %arg4[%c0_30, %c0_31], %88 {strides = array<i32>} : memref<8x128xf32, #tpu.memory_space<vmem>>, vector<8x128xf32>,
    return
  }
  func.func @transform_0(%arg0: i32) -> (i32, i32) {
    %c0_i32 = arith.constant 0 : i32
    %c0_i32_0 = arith.constant 0 : i32
    return %arg0, %c0_i32 : i32, i32
  }
  func.func @transform_1(%arg0: i32) -> (i32, i32) {
    %c0_i32 = arith.constant 0 : i32
    %c0_i32_0 = arith.constant 0 : i32
    %c0_i32_1 = arith.constant 0 : i32
    return %c0_i32, %c0_i32_0 : i32, i32
  }
  func.func @transform_2(%arg0: i32) -> (i32, i32) {
    %c0_i32 = arith.constant 0 : i32
    %c0_i32_0 = arith.constant 0 : i32
    %c0_i32_1 = arith.constant 0 : i32
    return %c0_i32, %c0_i32_0 : i32, i32
  }
  func.func @transform_3(%arg0: i32) -> (i32, i32) {
    %c0_i32 = arith.constant 0 : i32
    %c0_i32_0 = arith.constant 0 : i32
    return %arg0, %c0_i32 : i32, i32
  }
}

</mosaic_0001>

<llo_original>
// kernel: tpu_custom_call.1
$region0: #{tpu_custom_call.1}
  #allocation0 [shape = 'u32[]', space=smem, size = 0x4, offset = 0x4, fixed_abs, tag = 'smem constant byte address 0x4 - core index']
  #allocation1 [shape = 'u32[144,128]{1,0:T(1,128)}', space=vmem, size = 0x12000, scoped, tag = 'internal scratch']
  %s0 = inlined_call_operand.hbm [shape: f32[16,128], index: 0, kind: input, shape index: {}]
  %s1 = inlined_call_operand.hbm [shape: f32[384,128], index: 1, kind: input, shape index: {}]
  %s2 = inlined_call_operand.hbm [shape: f32[8,128], index: 2, kind: input, shape index: {}]
  %s3 = inlined_call_operand.hbm [shape: f32[16,128], index: 3, kind: output, shape index: {}]
  %s4 = sld [smem:[#allocation0]]
  $region57: #{tpu_custom_call.1} parent=0
    _
  %s6 = ssub.s32 1, %s4
  %s7 = scalar_select 0, %s6, %s4
  $region1: #{tpu_custom_call.1} parent=0
    #allocation2 [shape = 'u8[8192]{0}', space=vmem, size = 0x2000, scoped, tag = 'input window, operand 0']
    #allocation3 [shape = 's32[2]{0}', space=sflag, size = 0x8, scoped, tag = 'scoped memory for tpu_custom_call.1']
    #allocation4 [shape = 's32[2]{0}', space=sflag, size = 0x8, scoped, tag = 'scoped memory for tpu_custom_call.1']
    #allocation5 [shape = 'u8[196608]{0}', space=vmem, size = 0x30000, scoped, tag = 'input window, operand 1, single buffered']
    #allocation6 [shape = 's32[1]{0}', space=sflag, size = 0x4, scoped, tag = 'scoped memory for tpu_custom_call.1']
    #allocation7 [shape = 'u8[4096]{0}', space=vmem, size = 0x1000, scoped, tag = 'input window, operand 2, single buffered']
    #allocation8 [shape = 'u8[8192]{0}', space=vmem, size = 0x2000, scoped, tag = 'output window, operand 0']
    %8 = vsyncpa [#allocation3], 0
    %s9 = scalar_lea.sflag [#allocation3], 1
    %10 = vsyncpa %s9, 0
    %11 = vsyncpa [#allocation6], 0
    %12 = vsyncpa [#allocation4], 0
    %s13 = scalar_lea.sflag [#allocation4], 1
    %14 = vsyncpa %s13, 0
    loop: start=0, step=1, limit=4
    $region2: #{tpu_custom_call.1} parent=1 // loop_pre_header
      _
    $region3: #{tpu_custom_call.1} parent=1 // loop_header
      %s16 = sphi 0, %s20
      %p17 = scmp.ge.s32.totalorder %s16, 4
      %s26 = sphi 0, %s28
      %s29 = sphi 0, %s26
      %s30 = sphi 0, %s29
      %s46 = sphi 0, %s30
      %s50 = sphi 0, %s50
      %s52 = sphi 0, %s50
      %s53 = sphi 0, %s52
      %s67 = sphi 0, %s53
      %s71 = sphi 0, %s71
      %s73 = sphi 0, %s71
      %s74 = sphi 0, %s73
      %s88 = sphi 0, %s74
      %s94 = sphi 0, %s96
      %s97 = sphi 0, %s94
      %s98 = sphi 0, %s97
      %s114 = sphi 0, %s98
    $region4: #{tpu_custom_call.1} parent=1 // loop_header_branch
      %19 = sbr.rel (%p17) target = $region8
    $region5: #{tpu_custom_call.1} parent=1 // loop_body
      %s21 = ssub.s32 %s16, 1
      %s22 = ssub.s32 %s16, 2
      %s23 = sadd.s32 %s16, 1
      %s24 = ssub.s32 %s16, %s23
      %p25 = scmp.eq.s32.totalorder %s24, 0
      %s27 = sadd.s32 %s26, 1
      %s28 = scalar_select %p25, %s26, %s27
      %p31 = pneg %p25
      %p32 = scmp.eq.s32.totalorder %s16, 1
      %p33 = por %p31, %p32
      %p34 = scmp.ne.s32.totalorder %s26, %s29
      %p35 = scmp.eq.s32.totalorder %s16, 0
      %p36 = por %p34, %p35
      %p37 = scmp.ne.s32.totalorder %s26, %s29
      %p38 = scmp.eq.s32.totalorder %s21, 1
      %p39 = por %p37, %p38
      %p40 = scmp.ne.s32.totalorder %s29, %s30
      %p41 = scmp.eq.s32.totalorder %s21, 0
      %p42 = por %p40, %p41
      %p43 = scmp.ne.s32.totalorder %s29, %s30
      %p44 = scmp.eq.s32.totalorder %s22, 1
      %p45 = por %p43, %p44
      %p47 = scmp.ne.s32.totalorder %s30, %s46
      %p48 = scmp.eq.s32.totalorder %s22, 0
      %p49 = por %p47, %p48
      %s51 = sadd.s32 %s50, 1
      %p54 = scmp.eq.s32.totalorder %s16, 1
      %p55 = scmp.ne.s32.totalorder %s50, %s52
      %p56 = scmp.eq.s32.totalorder %s16, 0
      %p57 = por %p55, %p56
      %p58 = scmp.ne.s32.totalorder %s50, %s52
      %p59 = scmp.eq.s32.totalorder %s21, 1
      %p60 = por %p58, %p59
      %p61 = scmp.ne.s32.totalorder %s52, %s53
      %p62 = scmp.eq.s32.totalorder %s21, 0
      %p63 = por %p61, %p62
      %p64 = scmp.ne.s32.totalorder %s52, %s53
      %p65 = scmp.eq.s32.totalorder %s22, 1
      %p66 = por %p64, %p65
      %p68 = scmp.ne.s32.totalorder %s53, %s67
      %p69 = scmp.eq.s32.totalorder %s22, 0
      %p70 = por %p68, %p69
      %s72 = sadd.s32 %s71, 1
      %p75 = scmp.eq.s32.totalorder %s16, 1
      %p76 = scmp.ne.s32.totalorder %s71, %s73
      %p77 = scmp.eq.s32.totalorder %s16, 0
      %p78 = por %p76, %p77
      %p79 = scmp.ne.s32.totalorder %s71, %s73
      %p80 = scmp.eq.s32.totalorder %s21, 1
      %p81 = por %p79, %p80
      %p82 = scmp.ne.s32.totalorder %s73, %s74
      %p83 = scmp.eq.s32.totalorder %s21, 0
      %p84 = por %p82, %p83
      %p85 = scmp.ne.s32.totalorder %s73, %s74
      %p86 = scmp.eq.s32.totalorder %s22, 1
      %p87 = por %p85, %p86
      %p89 = scmp.ne.s32.totalorder %s74, %s88
      %p90 = scmp.eq.s32.totalorder %s22, 0
      %p91 = por %p89, %p90
      %s92 = ssub.s32 %s16, %s23
      %p93 = scmp.eq.s32.totalorder %s92, 0
      %s95 = sadd.s32 %s94, 1
      %s96 = scalar_select %p93, %s94, %s95
      %p99 = pneg %p93
      %p100 = scmp.eq.s32.totalorder %s16, 1
      %p101 = por %p99, %p100
      %p102 = scmp.ne.s32.totalorder %s94, %s97
      %p103 = scmp.eq.s32.totalorder %s16, 0
      %p104 = por %p102, %p103
      %p105 = scmp.ne.s32.totalorder %s94, %s97
      %p106 = scmp.eq.s32.totalorder %s21, 1
      %p107 = por %p105, %p106
      %p108 = scmp.ne.s32.totalorder %s97, %s98
      %p109 = scmp.eq.s32.totalorder %s21, 0
      %p110 = por %p108, %p109
      %p111 = scmp.ne.s32.totalorder %s97, %s98
      %p112 = scmp.eq.s32.totalorder %s22, 1
      %p113 = por %p111, %p112
      %p115 = scmp.ne.s32.totalorder %s98, %s114
      %p116 = scmp.eq.s32.totalorder %s22, 0
      %p117 = por %p115, %p116
      %p118 = scmp.le.s32.totalorder 1, %s16
      %p119 = scmp.lt.s32.totalorder %s16, 3
      %p120 = pnand %p118, %p119
      %p121 = pneg %p120
      // Predicated region
      $region9: #{tpu_custom_call.1} parent=5 // pred_check
        _
      $region10: #{tpu_custom_call.1} parent=5 // pred_check_branch
        %123 = sbr.rel (%p120) target = $region12
      $region11: #{tpu_custom_call.1} parent=5 // pred_region
        %s124 = ssub.s32 %s16, 1
        // Predicated region
        $region13: #{tpu_custom_call.1} parent=11 // pred_check
          %p125 = pneg %p63
        $region14: #{tpu_custom_call.1} parent=11 // pred_check_branch
          %127 = sbr.rel (%p125) target = $region16
        $region15: #{tpu_custom_call.1} parent=11 // pred_region
          %s129 = ssub.s32 6144, 6144
          %130 = vsyncadd [#allocation6], %s129
          %s131 = sshll.u32 [#allocation5], 4
          %s132 = int_to_ptr.vmem [resolvable:$true] %s131
          %137 = dma.hbm_to_vmem [thread:$0]  %s1, 6144, %s132, [#allocation6], 128, 128, 8
        $region16: #{tpu_custom_call.1} parent=11 // pred_fallthru
          _
        // Predicated region
        $region17: #{tpu_custom_call.1} parent=11 // pred_check
          %p138 = pneg %p84
        $region18: #{tpu_custom_call.1} parent=11 // pred_check_branch
          %140 = sbr.rel (%p138) target = $region20
        $region19: #{tpu_custom_call.1} parent=11 // pred_region
          %s142 = ssub.s32 128, 128
          %143 = vsyncadd [#allocation6], %s142
          %s145 = sshll.u32 [#allocation7], 4
          %s146 = int_to_ptr.vmem [resolvable:$true] %s145
          %148 = dma.hbm_to_vmem [thread:$0]  %s2, 128, %s146, [#allocation6]
        $region20: #{tpu_custom_call.1} parent=11 // pred_fallthru
          _
      $region12: #{tpu_custom_call.1} parent=5 // pred_fallthru
        _
      %p149 = scmp.lt.s32.totalorder %s16, 2
      // Predicated region
      $region21: #{tpu_custom_call.1} parent=5 // pred_check
        %p150 = pneg %p149
      $region22: #{tpu_custom_call.1} parent=5 // pred_check_branch
        %152 = sbr.rel (%p150) target = $region24
      $region23: #{tpu_custom_call.1} parent=5 // pred_region
        // Predicated region
        $region25: #{tpu_custom_call.1} parent=23 // pred_check
          %p153 = pneg %p36
        $region26: #{tpu_custom_call.1} parent=23 // pred_check_branch
          %155 = sbr.rel (%p153) target = $region28
        $region27: #{tpu_custom_call.1} parent=23 // pred_region
          %s156 = sand.u32 %s26, 1
          %s157 = scalar_lea.sflag [#allocation3], %s156
          %s158 = sand.u32 %s26, 1
          %s159 = smul.addr %s158, 8
          %s160 = scalar_lea.vmem [#allocation2], %s159
          %s162 = ssub.s32 128, 128
          %163 = vsyncadd %s157, %s162
          %s164 = smul.addr %s16, 128
          %s165 = scalar_lea.hbm %s0, %s164
          %s167 = sshll.u32 %s160, 4
          %s168 = int_to_ptr.vmem [resolvable:$true] %s167
          %170 = dma.hbm_to_vmem [thread:$0]  %s165, 128, %s168, %s157
        $region28: #{tpu_custom_call.1} parent=23 // pred_fallthru
          _
      $region24: #{tpu_custom_call.1} parent=5 // pred_fallthru
        _
      %p171 = scmp.le.s32.totalorder 1, %s16
      %p172 = scmp.lt.s32.totalorder %s16, 3
      %p173 = pnand %p171, %p172
      %p174 = pneg %p173
      // Predicated region
      $region29: #{tpu_custom_call.1} parent=5 // pred_check
        _
      $region30: #{tpu_custom_call.1} parent=5 // pred_check_branch
        %176 = sbr.rel (%p173) target = $region32
      $region31: #{tpu_custom_call.1} parent=5 // pred_region
        %s177 = ssub.s32 %s16, 1
        %s178 = sand.u32 %s29, 1
        %s179 = scalar_lea.sflag [#allocation3], %s178
        %s180 = sand.u32 %s29, 1
        %s181 = smul.addr %s180, 8
        %s182 = scalar_lea.vmem [#allocation2], %s181
        // Predicated region
        $region33: #{tpu_custom_call.1} parent=31 // pred_check
          %p183 = pneg %p42
        $region34: #{tpu_custom_call.1} parent=31 // pred_check_branch
          %185 = sbr.rel (%p183) target = $region36
        $region35: #{tpu_custom_call.1} parent=31 // pred_region
          %186 = dma.done %s179, 128
        $region36: #{tpu_custom_call.1} parent=31 // pred_fallthru
          _
        // Predicated region
        $region37: #{tpu_custom_call.1} parent=31 // pred_check
          %p187 = pneg %p63
        $region38: #{tpu_custom_call.1} parent=31 // pred_check_branch
          %189 = sbr.rel (%p187) target = $region40
        $region39: #{tpu_custom_call.1} parent=31 // pred_region
          %190 = dma.done [#allocation6], 6144
        $region40: #{tpu_custom_call.1} parent=31 // pred_fallthru
          _
        // Predicated region
        $region41: #{tpu_custom_call.1} parent=31 // pred_check
          %p191 = pneg %p84
        $region42: #{tpu_custom_call.1} parent=31 // pred_check_branch
          %193 = sbr.rel (%p191) target = $region44
        $region43: #{tpu_custom_call.1} parent=31 // pred_region
          %194 = dma.done [#allocation6], 128
        $region44: #{tpu_custom_call.1} parent=31 // pred_fallthru
          _
        %s195 = sand.u32 %s29, 1
        %s196 = scalar_lea.sflag [#allocation3], %s195
        %s197 = sand.u32 %s29, 1
        %s198 = smul.addr %s197, 8
        %s199 = scalar_lea.vmem [#allocation2], %s198
        %p200 = pneg %p42
        %p201 = pneg %p39
        %p202 = pneg %p63
        %p203 = pneg %p60
        %p204 = pneg %p84
        %p205 = pneg %p81
        %p206 = pneg %p110
        %p207 = pneg %p107
        %s208 = sand.u32 %s97, 1
        %s209 = scalar_lea.sflag [#allocation4], %s208
        %s210 = sand.u32 %s97, 1
        %s211 = smul.addr %s210, 8
        %s212 = scalar_lea.vmem [#allocation8], %s211
        %v213 = vld [vmem:[%s182] sm:$0xff]
        %v214 = vld [vmem:[#allocation5] sm:$0xff]
        %v215 = vld [vmem:[#allocation5 + $0x8] sm:$0xff]
        %v216 = vld [vmem:[#allocation5 + $0x10] sm:$0xff]
        %v217 = vld [vmem:[#allocation5 + $0x18] sm:$0xff]
        %v218 = vld [vmem:[#allocation5 + $0x20] sm:$0xff]
        %v219 = vld [vmem:[#allocation5 + $0x28] sm:$0xff]
        %v220 = vld [vmem:[#allocation5 + $0x30] sm:$0xff]
        %v221 = vld [vmem:[#allocation5 + $0x38] sm:$0xff]
        %v222 = vld [vmem:[#allocation5 + $0x40] sm:$0xff]
        %v223 = vld [vmem:[#allocation5 + $0x48] sm:$0xff]
        %v224 = vld [vmem:[#allocation5 + $0x50] sm:$0xff]
        %v225 = vld [vmem:[#allocation5 + $0x58] sm:$0xff]
        %v226 = vld [vmem:[#allocation5 + $0x60] sm:$0xff]
        %v227 = vld [vmem:[#allocation5 + $0x68] sm:$0xff]
        %v228 = vld [vmem:[#allocation5 + $0x70] sm:$0xff]
        %v229 = vld [vmem:[#allocation5 + $0x78] sm:$0xff]
        %v230 = vld [vmem:[#allocation7] sm:$0x1]
        %v231 = vlaneseq
        %v232 = vshrl.u32 %v231, 7
        %v233 = vsub.s32 0, %v232
        %v234 = vrot.slane %v230, %v233
        %235 = vmatprep.subr.mxu0 0.0
        %236 = vmatpush1.msra.mxu0 %v229
        %237 = vmatprep.subr.mxu0 0.0
        %238 = vmatpush1.msra.mxu0 %v228
        %239 = vmatprep.subr.mxu0 0.0
        %240 = vmatpush1.msra.mxu0 %v227
        %241 = vmatprep.subr.mxu0 0.0
        %242 = vmatpush1.msra.mxu0 %v226
        %243 = vmatprep.subr.mxu0 0.0
        %244 = vmatpush1.msra.mxu0 %v225
        %245 = vmatprep.subr.mxu0 0.0
        %246 = vmatpush1.msra.mxu0 %v224
        %247 = vmatprep.subr.mxu0 0.0
        %248 = vmatpush1.msra.mxu0 %v223
        %249 = vmatprep.subr.mxu0 0.0
        %250 = vmatpush1.msra.mxu0 %v222
        %251 = vmatprep.subr.mxu0 0.0
        %252 = vmatpush1.msra.mxu0 %v221
        %253 = vmatprep.subr.mxu0 0.0
        %254 = vmatpush1.msra.mxu0 %v220
        %255 = vmatprep.subr.mxu0 0.0
        %256 = vmatpush1.msra.mxu0 %v219
        %257 = vmatprep.subr.mxu0 0.0
        %258 = vmatpush1.msra.mxu0 %v218
        %259 = vmatprep.subr.mxu0 0.0
        %260 = vmatpush1.msra.mxu0 %v217
        %261 = vmatprep.subr.mxu0 0.0
        %262 = vmatpush1.msra.mxu0 %v216
        %263 = vmatprep.subr.mxu0 0.0
        %264 = vmatpush1.msra.mxu0 %v215
        %265 = vmatprep.subr.mxu0 0.0
        %266 = vmatpush1.msra.mxu0 %v214
        %267 = vmatprep.subr.mxu0 0.0
        %268 = vmatpush2.msra.mxu0 0.0
        %269 = vmatprep.subr.mxu0 0.0
        %270 = vmatpush2.msra.mxu0 0.0
        %271 = vmatprep.subr.mxu0 0.0
        %272 = vmatpush2.msra.mxu0 0.0
        %273 = vmatprep.subr.mxu0 0.0
        %274 = vmatpush2.msra.mxu0 0.0
        %275 = vmatprep.subr.mxu0 0.0
        %276 = vmatpush2.msra.mxu0 0.0
        %277 = vmatprep.subr.mxu0 0.0
        %278 = vmatpush2.msra.mxu0 0.0
        %279 = vmatprep.subr.mxu0 0.0
        %280 = vmatpush2.msra.mxu0 0.0
        %281 = vmatprep.subr.mxu0 0.0
        %282 = vmatpush2.msra.mxu0 0.0
        %283 = vmatprep.subr.mxu0 0.0
        %284 = vmatpush2.msra.mxu0 0.0
        %285 = vmatprep.subr.mxu0 0.0
        %286 = vmatpush2.msra.mxu0 0.0
        %287 = vmatprep.subr.mxu0 0.0
        %288 = vmatpush2.msra.mxu0 0.0
        %289 = vmatprep.subr.mxu0 0.0
        %290 = vmatpush2.msra.mxu0 0.0
        %291 = vmatprep.subr.mxu0 0.0
        %292 = vmatpush2.msra.mxu0 0.0
        %293 = vmatprep.subr.mxu0 0.0
        %294 = vmatpush2.msra.mxu0 0.0
        %295 = vmatprep.subr.mxu0 0.0
        %296 = vmatpush2.msra.mxu0 0.0
        %297 = vmatprep.subr.mxu0 0.0
        %298 = vmatpush2.msra.mxu0 0.0
        %299 = vmatprep.mubr.f32.mxu0 0.0
        %300 = vmatmul.mubr.f32.gmra.mxu0 %v213
        %v301 = vpop.f32.mrf.mxu0
        %v302 = vadd.f32 %v234, %v301
        %v303 = vpop.f32.mrf.mxu0
        %304 = vdwg.mxu0
        %v305 = vld [vmem:[#allocation7 + $0x1] sm:$0x1]
        %v306 = vld [vmem:[#allocation7 + $0x2] sm:$0x1]
        %v307 = vlaneseq
        %v308 = vand.u32 %v307, 127
        %vm309 = vcmp.lt.s32.totalorder %v308, 16
        %310 = vadd.xlane.f32.xlu0 %v302
        %v311 = vpop.xlane.xlu0 %310
        %v312 = vrcp.pop 16.0
        %v313 = vmul.f32 %v311, %v312
        %v314 = vsub.f32 %v302, %v313
        %v315 = vsel %vm309, 1, 0
        %vm316 = vcmp.eq.s32.totalorder %v315, 1
        %v317 = vsel %vm316, %v314, 0.0
        %v318 = vmul.f32 %v317, %v317
        %319 = vadd.xlane.f32.xlu0 %v318
        %v320 = vpop.xlane.xlu0 %319
        %v321 = vmul.f32 %v320, %v312
        %v322 = vadd.f32 %v321, 1e-05
        %v323 = vrsqrt.pop %v322
        %v324 = vmul.f32 %v317, %v323
        %v325 = vlaneseq
        %v326 = vshrl.u32 %v325, 7
        %v327 = vsub.s32 0, %v326
        %v328 = vrot.slane %v305, %v327
        %v329 = vmul.f32 %v324, %v328
        %v330 = vlaneseq
        %v331 = vshrl.u32 %v330, 7
        %v332 = vsub.s32 0, %v331
        %v333 = vrot.slane %v306, %v332
        %v334 = vadd.f32 %v329, %v333
        %v335 = vxor.u32 %v334, 2147483648
        %v336 = vmul.f32 %v335, 1.442695
        %v337 = vpow.pop %v336
        %v338 = vadd.f32 %v337, 1.0
        %v339 = vrcp.pop %v338
        %v340 = vmul.f32 1.0, %v339
        %v341 = vld [vmem:[#allocation5 + $0x80] sm:$0xff]
        %v342 = vld [vmem:[#allocation5 + $0x88] sm:$0xff]
        %v343 = vld [vmem:[#allocation5 + $0x90] sm:$0xff]
        %v344 = vld [vmem:[#allocation5 + $0x98] sm:$0xff]
        %v345 = vld [vmem:[#allocation5 + $0xa0] sm:$0xff]
        %v346 = vld [vmem:[#allocation5 + $0xa8] sm:$0xff]
        %v347 = vld [vmem:[#allocation5 + $0xb0] sm:$0xff]
        %v348 = vld [vmem:[#allocation5 + $0xb8] sm:$0xff]
        %v349 = vld [vmem:[#allocation5 + $0xc0] sm:$0xff]
        %v350 = vld [vmem:[#allocation5 + $0xc8] sm:$0xff]
        %v351 = vld [vmem:[#allocation5 + $0xd0] sm:$0xff]
        %v352 = vld [vmem:[#allocation5 + $0xd8] sm:$0xff]
        %v353 = vld [vmem:[#allocation5 + $0xe0] sm:$0xff]
        %v354 = vld [vmem:[#allocation5 + $0xe8] sm:$0xff]
        %v355 = vld [vmem:[#allocation5 + $0xf0] sm:$0xff]
        %v356 = vld [vmem:[#allocation5 + $0xf8] sm:$0xff]
        %v357 = vld [vmem:[#allocation7 + $0x3] sm:$0x1]
        %v358 = vlaneseq
        %v359 = vshrl.u32 %v358, 7
        %v360 = vsub.s32 0, %v359
        %v361 = vrot.slane %v357, %v360
        %362 = vmatprep.subr.mxu0 0.0
        %363 = vmatpush1.msra.mxu0 %v356
        %364 = vmatprep.subr.mxu0 0.0
        %365 = vmatpush1.msra.mxu0 %v355
        %366 = vmatprep.subr.mxu0 0.0
        %367 = vmatpush1.msra.mxu0 %v354
        %368 = vmatprep.subr.mxu0 0.0
        %369 = vmatpush1.msra.mxu0 %v353
        %370 = vmatprep.subr.mxu0 0.0
        %371 = vmatpush1.msra.mxu0 %v352
        %372 = vmatprep.subr.mxu0 0.0
        %373 = vmatpush1.msra.mxu0 %v351
        %374 = vmatprep.subr.mxu0 0.0
        %375 = vmatpush1.msra.mxu0 %v350
        %376 = vmatprep.subr.mxu0 0.0
        %377 = vmatpush1.msra.mxu0 %v349
        %378 = vmatprep.subr.mxu0 0.0
        %379 = vmatpush1.msra.mxu0 %v348
        %380 = vmatprep.subr.mxu0 0.0
        %381 = vmatpush1.msra.mxu0 %v347
        %382 = vmatprep.subr.mxu0 0.0
        %383 = vmatpush1.msra.mxu0 %v346
        %384 = vmatprep.subr.mxu0 0.0
        %385 = vmatpush1.msra.mxu0 %v345
        %386 = vmatprep.subr.mxu0 0.0
        %387 = vmatpush1.msra.mxu0 %v344
        %388 = vmatprep.subr.mxu0 0.0
        %389 = vmatpush1.msra.mxu0 %v343
        %390 = vmatprep.subr.mxu0 0.0
        %391 = vmatpush1.msra.mxu0 %v342
        %392 = vmatprep.subr.mxu0 0.0
        %393 = vmatpush1.msra.mxu0 %v341
        %394 = vmatprep.subr.mxu0 0.0
        %395 = vmatpush2.msra.mxu0 0.0
        %396 = vmatprep.subr.mxu0 0.0
        %397 = vmatpush2.msra.mxu0 0.0
        %398 = vmatprep.subr.mxu0 0.0
        %399 = vmatpush2.msra.mxu0 0.0
        %400 = vmatprep.subr.mxu0 0.0
        %401 = vmatpush2.msra.mxu0 0.0
        %402 = vmatprep.subr.mxu0 0.0
        %403 = vmatpush2.msra.mxu0 0.0
        %404 = vmatprep.subr.mxu0 0.0
        %405 = vmatpush2.msra.mxu0 0.0
        %406 = vmatprep.subr.mxu0 0.0
        %407 = vmatpush2.msra.mxu0 0.0
        %408 = vmatprep.subr.mxu0 0.0
        %409 = vmatpush2.msra.mxu0 0.0
        %410 = vmatprep.subr.mxu0 0.0
        %411 = vmatpush2.msra.mxu0 0.0
        %412 = vmatprep.subr.mxu0 0.0
        %413 = vmatpush2.msra.mxu0 0.0
        %414 = vmatprep.subr.mxu0 0.0
        %415 = vmatpush2.msra.mxu0 0.0
        %416 = vmatprep.subr.mxu0 0.0
        %417 = vmatpush2.msra.mxu0 0.0
        %418 = vmatprep.subr.mxu0 0.0
        %419 = vmatpush2.msra.mxu0 0.0
        %420 = vmatprep.subr.mxu0 0.0
        %421 = vmatpush2.msra.mxu0 0.0
        %422 = vmatprep.subr.mxu0 0.0
        %423 = vmatpush2.msra.mxu0 0.0
        %424 = vmatprep.subr.mxu0 0.0
        %425 = vmatpush2.msra.mxu0 0.0
        %426 = vmatprep.mubr.f32.mxu0 0.0
        %427 = vmatmul.mubr.f32.gmra.mxu0 %v340
        %v428 = vpop.f32.mrf.mxu0
        %v429 = vadd.f32 %v361, %v428
        %v430 = vpop.f32.mrf.mxu0
        %431 = vdwg.mxu0
        %v432 = vld [vmem:[#allocation7 + $0x4] sm:$0x1]
        %v433 = vld [vmem:[#allocation7 + $0x5] sm:$0x1]
        %vm434 = vcmp.lt.s32.totalorder %v308, 32
        %435 = vadd.xlane.f32.xlu0 %v429
        %v436 = vpop.xlane.xlu0 %435
        %v437 = vrcp.pop 32.0
        %v438 = vmul.f32 %v436, %v437
        %v439 = vsub.f32 %v429, %v438
        %v440 = vsel %vm434, 1, 0
        %vm441 = vcmp.eq.s32.totalorder %v440, 1
        %v442 = vsel %vm441, %v439, 0.0
        %v443 = vmul.f32 %v442, %v442
        %444 = vadd.xlane.f32.xlu0 %v443
        %v445 = vpop.xlane.xlu0 %444
        %v446 = vmul.f32 %v445, %v437
        %v447 = vadd.f32 %v446, 1e-05
        %v448 = vrsqrt.pop %v447
        %v449 = vmul.f32 %v442, %v448
        %v450 = vlaneseq
        %v451 = vshrl.u32 %v450, 7
        %v452 = vsub.s32 0, %v451
        %v453 = vrot.slane %v432, %v452
        %v454 = vmul.f32 %v449, %v453
        %v455 = vlaneseq
        %v456 = vshrl.u32 %v455, 7
        %v457 = vsub.s32 0, %v456
        %v458 = vrot.slane %v433, %v457
        %v459 = vadd.f32 %v454, %v458
        %v460 = vxor.u32 %v459, 2147483648
        %v461 = vmul.f32 %v460, 1.442695
        %v462 = vpow.pop %v461
        %v463 = vadd.f32 %v462, 1.0
        %v464 = vrcp.pop %v463
        %v465 = vmul.f32 1.0, %v464
        %v466 = vld [vmem:[#allocation5 + $0x100] sm:$0xff]
        %v467 = vld [vmem:[#allocation5 + $0x108] sm:$0xff]
        %v468 = vld [vmem:[#allocation5 + $0x110] sm:$0xff]
        %v469 = vld [vmem:[#allocation5 + $0x118] sm:$0xff]
        %v470 = vld [vmem:[#allocation5 + $0x120] sm:$0xff]
        %v471 = vld [vmem:[#allocation5 + $0x128] sm:$0xff]
        %v472 = vld [vmem:[#allocation5 + $0x130] sm:$0xff]
        %v473 = vld [vmem:[#allocation5 + $0x138] sm:$0xff]
        %v474 = vld [vmem:[#allocation5 + $0x140] sm:$0xff]
        %v475 = vld [vmem:[#allocation5 + $0x148] sm:$0xff]
        %v476 = vld [vmem:[#allocation5 + $0x150] sm:$0xff]
        %v477 = vld [vmem:[#allocation5 + $0x158] sm:$0xff]
        %v478 = vld [vmem:[#allocation5 + $0x160] sm:$0xff]
        %v479 = vld [vmem:[#allocation5 + $0x168] sm:$0xff]
        %v480 = vld [vmem:[#allocation5 + $0x170] sm:$0xff]
        %v481 = vld [vmem:[#allocation5 + $0x178] sm:$0xff]
        %v482 = vld [vmem:[#allocation7 + $0x6] sm:$0x1]
        %v483 = vlaneseq
        %v484 = vshrl.u32 %v483, 7
        %v485 = vsub.s32 0, %v484
        %v486 = vrot.slane %v482, %v485
        %487 = vmatprep.subr.mxu0 0.0
        %488 = vmatpush1.msra.mxu0 %v481
        %489 = vmatprep.subr.mxu0 0.0
        %490 = vmatpush1.msra.mxu0 %v480
        %491 = vmatprep.subr.mxu0 0.0
        %492 = vmatpush1.msra.mxu0 %v479
        %493 = vmatprep.subr.mxu0 0.0
        %494 = vmatpush1.msra.mxu0 %v478
        %495 = vmatprep.subr.mxu0 0.0
        %496 = vmatpush1.msra.mxu0 %v477
        %497 = vmatprep.subr.mxu0 0.0
        %498 = vmatpush1.msra.mxu0 %v476
        %499 = vmatprep.subr.mxu0 0.0
        %500 = vmatpush1.msra.mxu0 %v475
        %501 = vmatprep.subr.mxu0 0.0
        %502 = vmatpush1.msra.mxu0 %v474
        %503 = vmatprep.subr.mxu0 0.0
        %504 = vmatpush1.msra.mxu0 %v473
        %505 = vmatprep.subr.mxu0 0.0
        %506 = vmatpush1.msra.mxu0 %v472
        %507 = vmatprep.subr.mxu0 0.0
        %508 = vmatpush1.msra.mxu0 %v471
        %509 = vmatprep.subr.mxu0 0.0
        %510 = vmatpush1.msra.mxu0 %v470
        %511 = vmatprep.subr.mxu0 0.0
        %512 = vmatpush1.msra.mxu0 %v469
        %513 = vmatprep.subr.mxu0 0.0
        %514 = vmatpush1.msra.mxu0 %v468
        %515 = vmatprep.subr.mxu0 0.0
        %516 = vmatpush1.msra.mxu0 %v467
        %517 = vmatprep.subr.mxu0 0.0
        %518 = vmatpush1.msra.mxu0 %v466
        %519 = vmatprep.subr.mxu0 0.0
        %520 = vmatpush2.msra.mxu0 0.0
        %521 = vmatprep.subr.mxu0 0.0
        %522 = vmatpush2.msra.mxu0 0.0
        %523 = vmatprep.subr.mxu0 0.0
        %524 = vmatpush2.msra.mxu0 0.0
        %525 = vmatprep.subr.mxu0 0.0
        %526 = vmatpush2.msra.mxu0 0.0
        %527 = vmatprep.subr.mxu0 0.0
        %528 = vmatpush2.msra.mxu0 0.0
        %529 = vmatprep.subr.mxu0 0.0
        %530 = vmatpush2.msra.mxu0 0.0
        %531 = vmatprep.subr.mxu0 0.0
        %532 = vmatpush2.msra.mxu0 0.0
        %533 = vmatprep.subr.mxu0 0.0
        %534 = vmatpush2.msra.mxu0 0.0
        %535 = vmatprep.subr.mxu0 0.0
        %536 = vmatpush2.msra.mxu0 0.0
        %537 = vmatprep.subr.mxu0 0.0
        %538 = vmatpush2.msra.mxu0 0.0
        %539 = vmatprep.subr.mxu0 0.0
        %540 = vmatpush2.msra.mxu0 0.0
        %541 = vmatprep.subr.mxu0 0.0
        %542 = vmatpush2.msra.mxu0 0.0
        %543 = vmatprep.subr.mxu0 0.0
        %544 = vmatpush2.msra.mxu0 0.0
        %545 = vmatprep.subr.mxu0 0.0
        %546 = vmatpush2.msra.mxu0 0.0
        %547 = vmatprep.subr.mxu0 0.0
        %548 = vmatpush2.msra.mxu0 0.0
        %549 = vmatprep.subr.mxu0 0.0
        %550 = vmatpush2.msra.mxu0 0.0
        %551 = vmatprep.mubr.f32.mxu0 0.0
        %552 = vmatmul.mubr.f32.gmra.mxu0 %v465
        %v553 = vpop.f32.mrf.mxu0
        %v554 = vadd.f32 %v486, %v553
        %v555 = vpop.f32.mrf.mxu0
        %556 = vdwg.mxu0
        %v557 = vxor.u32 %v554, 2147483648
        %v558 = vmul.f32 %v557, 1.442695
        %v559 = vpow.pop %v558
        %v560 = vadd.f32 %v559, 1.0
        %v561 = vrcp.pop %v560
        %v562 = vmul.f32 1.0, %v561
        %563 = vst [vmem:[%s212] sm:$0xff] %v562
        %s564 = sand.u32 %s97, 1
        %s565 = scalar_lea.sflag [#allocation4], %s564
        %s566 = sand.u32 %s97, 1
        %s567 = smul.addr %s566, 8
        %s568 = scalar_lea.vmem [#allocation8], %s567
        // Predicated region
        $region45: #{tpu_custom_call.1} parent=31 // pred_check
          %p569 = pneg %p107
        $region46: #{tpu_custom_call.1} parent=31 // pred_check_branch
          %571 = sbr.rel (%p569) target = $region48
        $region47: #{tpu_custom_call.1} parent=31 // pred_region
          %s573 = ssub.s32 128, 128
          %574 = vsyncadd %s565, %s573
          %s575 = smul.addr %s21, 128
          %s576 = scalar_lea.hbm %s3, %s575
          %s578 = sshll.u32 %s568, 4
          %s579 = int_to_ptr.vmem [resolvable:$true] %s578
          %581 = dma.vmem_to_hbm [thread:$0]  %s579, 128, %s576, %s565
        $region48: #{tpu_custom_call.1} parent=31 // pred_fallthru
          _
      $region32: #{tpu_custom_call.1} parent=5 // pred_fallthru
        _
      %p582 = scmp.le.s32.totalorder 2, %s16
      // Predicated region
      $region49: #{tpu_custom_call.1} parent=5 // pred_check
        %p583 = pneg %p582
      $region50: #{tpu_custom_call.1} parent=5 // pred_check_branch
        %585 = sbr.rel (%p583) target = $region52
      $region51: #{tpu_custom_call.1} parent=5 // pred_region
        %s586 = ssub.s32 %s16, 2
        // Predicated region
        $region53: #{tpu_custom_call.1} parent=51 // pred_check
          %p587 = pneg %p113
        $region54: #{tpu_custom_call.1} parent=51 // pred_check_branch
          %589 = sbr.rel (%p587) target = $region56
        $region55: #{tpu_custom_call.1} parent=51 // pred_region
          %s590 = sand.u32 %s98, 1
          %s591 = scalar_lea.sflag [#allocation4], %s590
          %s592 = sand.u32 %s98, 1
          %s593 = smul.addr %s592, 8
          %s594 = scalar_lea.vmem [#allocation8], %s593
          %595 = dma.done %s591, 128
        $region56: #{tpu_custom_call.1} parent=51 // pred_fallthru
          _
      $region52: #{tpu_custom_call.1} parent=5 // pred_fallthru
        _
    $region6: #{tpu_custom_call.1} parent=1 // loop_footer
      %s20 = sadd.s32 1, %s16
    $region7: #{tpu_custom_call.1} parent=1 // loop_footer_branch
      %15 = sbr.rel target = $region3
    $region8: #{tpu_custom_call.1} parent=1 // loop_exit
      _
    %596 = vsyncpa [#allocation3], 1
    %s597 = scalar_lea.sflag [#allocation3], 1
    %598 = vsyncpa %s597, 1
    %599 = vsyncpa [#allocation6], 1
    %600 = vsyncpa [#allocation4], 1
    %s601 = scalar_lea.sflag [#allocation4], 1
    %602 = vsyncpa %s601, 1

</llo_original>
